<compile_context>
chip_gen: v6e
topology: v6e:2x2x1
jax: 0.10.0
libtpu: 0.0.40
codegen_flags: <defaults>
</compile_context>

<pallas_src>
import jax
import jax.numpy as jnp
from jax.experimental import pallas as pl
from jax.experimental.pallas import tpu as pltpu


def _round_up(n, m):
    return ((n + m - 1) // m) * m


def _cdiv(a, b):
    return -(-a // b)


# --------------------------------------------------------------------------
# Kernels
# --------------------------------------------------------------------------
def _h2_kernel(x_ref, c_ref, w1x_ref, w1c_ref, s_ref, h2_ref):
    """Layers 1-2: h2 = relu(relu([x, c] . w1 + b1) * w2 + b2), per batch row.

    s_ref (SMEM, f32[3]) holds [b1, w2, b2] as scalars.  Hidden dim is 1, so
    layer 1 is a row-wise multiply + lane reduction (VPU/XLU, no MXU), and
    layer 2 is a scalar affine.
    """
    h1 = (jnp.sum(x_ref[...] * w1x_ref[...], axis=-1, keepdims=True)
          + jnp.sum(c_ref[...] * w1c_ref[...], axis=-1, keepdims=True)
          + s_ref[0])
    h1 = jnp.maximum(h1, 0.0)
    h2_ref[...] = jnp.maximum(h1 * s_ref[1] + s_ref[2], 0.0)


def _rgbd_kernel(h2_ref, w3r_ref, b3r_ref, w3d_ref, b3d_ref, yr_ref, yd_ref):
    """Layer 3: outer product (TB,1) x (1,TP*{3,1}) -> broadcast FMA + store."""
    h2 = h2_ref[...]                                            # (TB, 1) f32
    yr_ref[...] = (h2 * w3r_ref[...] + b3r_ref[...]).astype(yr_ref.dtype)
    yd_ref[...] = (h2 * w3d_ref[...] + b3d_ref[...]).astype(yd_ref.dtype)


# --------------------------------------------------------------------------
# One-time parameter preparation (hoisted out of the per-call path)
# --------------------------------------------------------------------------
def prepare_params(params, x_feature_dim, height, width):
    """Reshuffle PyTorch-layout params into kernel-friendly arrays (done once)."""
    (w1, b1), (w2, b2), (w3, b3) = params        # torch layout: W (out,in), b (out,)
    P = height * width

    w1 = w1.astype(jnp.float32)
    w1_x = w1[:, :x_feature_dim]                 # (1, Fx)
    w1_c = w1[:, x_feature_dim:]                 # (1, Fc)
    scalars = jnp.stack([b1[0], w2[0, 0], b2[0]]).astype(jnp.float32)   # -> SMEM

    # Layer-3 columns, split by channel: rgb (interleaved (pixel, ch)) / depth.
    w3_hw4 = w3.reshape(P, 4).astype(jnp.float32)
    b3_hw4 = b3.reshape(P, 4).astype(jnp.float32)
    return {
        "w1_x": w1_x,
        "w1_c": w1_c,
        "scalars": scalars,
        "w3_rgb": w3_hw4[:, :3].reshape(1, P * 3),
        "b3_rgb": b3_hw4[:, :3].reshape(1, P * 3),
        "w3_dep": w3_hw4[:, 3].reshape(1, P),
        "b3_dep": b3_hw4[:, 3].reshape(1, P),
    }


# --------------------------------------------------------------------------
# Forward
# --------------------------------------------------------------------------
def mlp_forward(x, c, prepped, height, width, out_dtype=jnp.float32):
    """Equivalent of MLP.forward(x, c): returns (rgb, depth)."""
    B = x.shape[0]
    x_flat = x.reshape(B, -1).astype(jnp.float32)
    c = c.astype(jnp.float32)
    Fx = x_flat.shape[1]
    Fc = c.shape[1]
    P = height * width

    # ---------------- Stage 1: h2 = relu(relu([x,c].w1+b1)*w2+b2)  (B,1) ----
    TBH = B if B <= 1024 else 1024
    h2 = pl.pallas_call(
        _h2_kernel,
        out_shape=jax.ShapeDtypeStruct((B, 1), jnp.float32),
        grid=(_cdiv(B, TBH),),
        in_specs=[
            pl.BlockSpec((TBH, Fx), lambda i: (i, 0)),             # x tile
            pl.BlockSpec((TBH, Fc), lambda i: (i, 0)),             # c tile
            pl.BlockSpec((1, Fx), lambda i: (0, 0)),               # w1 (x cols)
            pl.BlockSpec((1, Fc), lambda i: (0, 0)),               # w1 (c cols)
            pl.BlockSpec(memory_space=pltpu.MemorySpace.SMEM),     # [b1, w2, b2]
        ],
        out_specs=pl.BlockSpec((TBH, 1), lambda i: (i, 0)),
        compiler_params=pltpu.CompilerParams(
            dimension_semantics=("parallel",)),
    )(x_flat, c, prepped["w1_x"], prepped["w1_c"], prepped["scalars"])

    # ---------------- Stage 2: layer 3 broadcast + store stream -------------
    # Tile selection: batch tile <=256 rows (exact B when it fits -> no ragged
    # block); pixel tile <=1024 so double-buffered outputs stay ~8 MiB (well
    # under v7x's 32 MiB scoped / 64 MiB physical VMEM and v5e/v6e defaults)
    # while amortizing the ~0.35 us per-grid-step overhead.
    TB = B if B <= 256 else 256
    if P > 1024:
        TP = 1024
    elif _cdiv(B, TB) == 1 and P >= 256:
        # Give the second v7x TensorCore a pixel tile to work on.
        TP = _round_up(_cdiv(P, 2), 128)
    else:
        TP = P
    grid = (_cdiv(B, TB), _cdiv(P, TP))

    out_itemsize = jnp.dtype(out_dtype).itemsize
    cost = pl.CostEstimate(
        flops=int(2 * B * P * 4),
        transcendentals=0,
        bytes_accessed=int(B * P * 4 * out_itemsize + 8 * P * 4 + B * 4),
    )

    y_rgb, y_dep = pl.pallas_call(
        _rgbd_kernel,
        out_shape=(jax.ShapeDtypeStruct((B, P * 3), out_dtype),
                   jax.ShapeDtypeStruct((B, P), out_dtype)),
        grid=grid,
        in_specs=[
            pl.BlockSpec((TB, 1), lambda i, j: (i, 0)),            # h2
            pl.BlockSpec((1, TP * 3), lambda i, j: (0, j)),        # w3 rgb cols
            pl.BlockSpec((1, TP * 3), lambda i, j: (0, j)),        # b3 rgb cols
            pl.BlockSpec((1, TP), lambda i, j: (0, j)),            # w3 depth cols
            pl.BlockSpec((1, TP), lambda i, j: (0, j)),            # b3 depth cols
        ],
        out_specs=(pl.BlockSpec((TB, TP * 3), lambda i, j: (i, j)),
                   pl.BlockSpec((TB, TP), lambda i, j: (i, j))),
        compiler_params=pltpu.CompilerParams(
            dimension_semantics=("parallel", "parallel"),
            # Headroom for larger TB/TP sweeps; <= v7x's scoped default and
            # raises v5e's ~16 MiB default.
            vmem_limit_bytes=32 * 1024 * 1024),
        cost_estimate=cost,
    )(h2, prepped["w3_rgb"], prepped["b3_rgb"],
      prepped["w3_dep"], prepped["b3_dep"])

    rgb = y_rgb.reshape(B, height, width, 3)
    depth = y_dep.reshape(B, height, width)
    # Match torch .squeeze() semantics (drops B / H / W dims that equal 1).
    return jnp.squeeze(rgb), jnp.squeeze(depth)


# --------------------------------------------------------------------------
# Init + reference + self-test
# --------------------------------------------------------------------------
def init_params(key, input_dim, height, width):
    """Deterministic PyTorch-style (uniform +-1/sqrt(fan_in)) init, torch layout."""
    out = height * width * 4
    dims = [(input_dim, 1), (1, 1), (1, out)]     # (fan_in, fan_out) per Linear
    params = []
    for fan_in, fan_out in dims:
        key, kw, kb = jax.random.split(key, 3)
        bound = 1.0 / float(fan_in) ** 0.5
        w = jax.random.uniform(kw, (fan_out, fan_in), jnp.float32, -bound, bound)
        b = jax.random.uniform(kb, (fan_out,), jnp.float32, -bound, bound)
        params.append((w, b))
    return params


def _reference(x, c, params):
    """Pure-JAX reference of the same MLP for a sanity check."""
    (w1, b1), (w2, b2), (w3, b3) = params
    xc = jnp.concatenate([x.reshape(x.shape[0], -1), c], axis=1).astype(jnp.float32)
    h = jnp.maximum(xc @ w1.T + b1, 0.0)
    h = jnp.maximum(h @ w2.T + b2, 0.0)
    return h @ w3.T + b3


if __name__ == "__main__":
    B, H, W = 2, 8, 8
    x_feat_shape = (4, 4)        # x is (B, 4, 4) -> 16 flattened features
    c_dim = 4                    # c is (B, 4) -> input_dim = 20
    Fx = x_feat_shape[0] * x_feat_shape[1]
    input_dim = Fx + c_dim

    key = jax.random.PRNGKey(0)
    k_params, k_x, k_c = jax.random.split(key, 3)
    params = init_params(k_params, input_dim, H, W)
    x = jax.random.normal(k_x, (B,) + x_feat_shape, jnp.float32)
    c = jax.random.normal(k_c, (B, c_dim), jnp.float32)

    # One-time param prep (amortized across forward calls).
    prepped = prepare_params(params, x_feature_dim=Fx, height=H, width=W)

    rgb, depth = mlp_forward(x, c, prepped, H, W)
    rgb = jax.block_until_ready(rgb)
    depth = jax.block_until_ready(depth)

    # Shape check vs PyTorch semantics (B=2 -> squeeze is a no-op).
    assert rgb.shape == (B, H, W, 3), rgb.shape
    assert depth.shape == (B, H, W), depth.shape

    # Numerical check against a pure-JAX reference.
    y_ref = _reference(x, c, params).reshape(B, H, W, 4)
    assert jnp.allclose(rgb, y_ref[..., :3], atol=1e-5, rtol=1e-5)
    assert jnp.allclose(depth, y_ref[..., 3], atol=1e-5, rtol=1e-5)

    print("KERNEL_OK")
</pallas_src>

<mosaic_0001>
module attributes {stable_mosaic.version = 11 : i64} {
  func.func @_h2_kernel(%arg0: i32, %arg1: memref<2x16xf32, #tpu.memory_space<vmem>>, %arg2: memref<2x4xf32, #tpu.memory_space<vmem>>, %arg3: memref<1x16xf32, #tpu.memory_space<vmem>>, %arg4: memref<1x4xf32, #tpu.memory_space<vmem>>, %arg5: memref<3xf32, #tpu.memory_space<smem>>, %arg6: memref<2x1xf32, #tpu.memory_space<vmem>>) attributes {dimension_semantics = [#tpu.dimension_semantics<parallel>], iteration_bounds = array<i64: 1>, scalar_prefetch = 0 : i64, scratch_operands = 0 : i64, tpu.core_type = #tpu.core_type<tc>, window_params = [{transform_indices = @transform_0, window_bounds = array<i64: 2, 16>}, {transform_indices = @transform_1, window_bounds = array<i64: 2, 4>}, {pipeline_mode = #tpu.pipeline_mode<synchronous>, transform_indices = @transform_2, window_bounds = array<i64: 1, 16>}, {pipeline_mode = #tpu.pipeline_mode<synchronous>, transform_indices = @transform_3, window_bounds = array<i64: 1, 4>}, {transform_indices = @transform_4, window_bounds = array<i64: 3>}, {transform_indices = @transform_5, window_bounds = array<i64: 2, 1>}]} {
    %c0 = arith.constant 0 : index
    %c0_0 = arith.constant 0 : index
    %0 = vector.load %arg1[%c0, %c0_0] : memref<2x16xf32, #tpu.memory_space<vmem>>, vector<2x16xf32>
    %c0_1 = arith.constant 0 : index
    %c0_2 = arith.constant 0 : index
    %1 = vector.load %arg3[%c0_1, %c0_2] : memref<1x16xf32, #tpu.memory_space<vmem>>, vector<1x16xf32>
    %2 = vector.broadcast %1 : vector<1x16xf32> to vector<2x16xf32>
    %3 = arith.mulf %0, %2 : vector<2x16xf32>
    %cst = arith.constant dense<0.000000e+00> : vector<2xf32>
    %4 = vector.multi_reduction <add>, %3, %cst [1] : vector<2x16xf32> to vector<2xf32>
    %5 = vector.shape_cast %4 : vector<2xf32> to vector<2x1xf32>
    %c0_3 = arith.constant 0 : index
    %c0_4 = arith.constant 0 : index
    %6 = vector.load %arg2[%c0_3, %c0_4] : memref<2x4xf32, #tpu.memory_space<vmem>>, vector<2x4xf32>
    %c0_5 = arith.constant 0 : index
    %c0_6 = arith.constant 0 : index
    %7 = vector.load %arg4[%c0_5, %c0_6] : memref<1x4xf32, #tpu.memory_space<vmem>>, vector<1x4xf32>
    %8 = vector.broadcast %7 : vector<1x4xf32> to vector<2x4xf32>
    %9 = arith.mulf %6, %8 : vector<2x4xf32>
    %cst_7 = arith.constant dense<0.000000e+00> : vector<2xf32>
    %10 = vector.multi_reduction <add>, %9, %cst_7 [1] : vector<2x4xf32> to vector<2xf32>
    %11 = vector.shape_cast %10 : vector<2xf32> to vector<2x1xf32>
    %12 = arith.addf %5, %11 : vector<2x1xf32>
    %c0_8 = arith.constant 0 : index
    %13 = memref.load %arg5[%c0_8] : memref<3xf32, #tpu.memory_space<smem>>
    %14 = vector.broadcast %13 : f32 to vector<2x1xf32>
    %15 = arith.addf %12, %14 : vector<2x1xf32>
    %cst_9 = arith.constant 0.000000e+00 : f32
    %16 = vector.broadcast %cst_9 : f32 to vector<2x1xf32>
    %17 = arith.maximumf %15, %16 : vector<2x1xf32>
    %c1 = arith.constant 1 : index
    %18 = memref.load %arg5[%c1] : memref<3xf32, #tpu.memory_space<smem>>
    %19 = vector.broadcast %18 : f32 to vector<2x1xf32>
    %20 = arith.mulf %17, %19 : vector<2x1xf32>
    %c2 = arith.constant 2 : index
    %21 = memref.load %arg5[%c2] : memref<3xf32, #tpu.memory_space<smem>>
    %22 = vector.broadcast %21 : f32 to vector<2x1xf32>
    %23 = arith.addf %20, %22 : vector<2x1xf32>
    %cst_10 = arith.constant 0.000000e+00 : f32
    %24 = vector.broadcast %cst_10 : f32 to vector<2x1xf32>
    %25 = arith.maximumf %23, %24 : vector<2x1xf32>
    %c0_11 = arith.constant 0 : index
    %c0_12 = arith.constant 0 : index
    %26 = vector.load %arg6[%c0_11, %c0_12] : memref<2x1xf32, #tpu.memory_space<vmem>>, vector<2x1xf32>
    tpu.vector_store %arg6[%c0_11, %c0_12], %25 {strides = array<i32>} : memref<2x1xf32, #tpu.memory_space<vmem>>, vector<2x1xf32>,
    return
  }
  func.func @transform_0(%arg0: i32) -> (i32, i32) {
    %c0_i32 = arith.constant 0 : i32
    %c0_i32_0 = arith.constant 0 : i32
    return %arg0, %c0_i32 : i32, i32
  }
  func.func @transform_1(%arg0: i32) -> (i32, i32) {
    %c0_i32 = arith.constant 0 : i32
    %c0_i32_0 = arith.constant 0 : i32
    return %arg0, %c0_i32 : i32, i32
  }
  func.func @transform_2(%arg0: i32) -> (i32, i32) {
    %c0_i32 = arith.constant 0 : i32
    %c0_i32_0 = arith.constant 0 : i32
    %c0_i32_1 = arith.constant 0 : i32
    return %c0_i32, %c0_i32_0 : i32, i32
  }
  func.func @transform_3(%arg0: i32) -> (i32, i32) {
    %c0_i32 = arith.constant 0 : i32
    %c0_i32_0 = arith.constant 0 : i32
    %c0_i32_1 = arith.constant 0 : i32
    return %c0_i32, %c0_i32_0 : i32, i32
  }
  func.func @transform_4(%arg0: i32) -> i32 {
    %c0_i32 = arith.constant 0 : i32
    %c0_i32_0 = arith.constant 0 : i32
    return %c0_i32 : i32
  }
  func.func @transform_5(%arg0: i32) -> (i32, i32) {
    %c0_i32 = arith.constant 0 : i32
    %c0_i32_0 = arith.constant 0 : i32
    return %arg0, %c0_i32 : i32, i32
  }
}

</mosaic_0001>

<llo_original>
// kernel: tpu_custom_call.1
$region0: #{tpu_custom_call.1}
  #allocation0 [shape = 'u32[]', space=smem, size = 0x4, offset = 0x4, fixed_abs, tag = 'smem constant byte address 0x4 - core index']
  #allocation1 [shape = 'u32[144,128]{1,0:T(1,128)}', space=vmem, size = 0x12000, scoped, tag = 'internal scratch']
  %s0 = inlined_call_operand.hbm [shape: f32[2,16], index: 0, kind: input, shape index: {}]
  %s1 = inlined_call_operand.hbm [shape: f32[2,4], index: 1, kind: input, shape index: {}]
  %s2 = inlined_call_operand.vmem [shape: f32[1,16], index: 2, kind: input, shape index: {}]
  %s3 = inlined_call_operand.vmem [shape: f32[1,4], index: 3, kind: input, shape index: {}]
  %s4 = inlined_call_operand.vmem [shape: f32[3], index: 4, kind: input, shape index: {}]
  %s5 = inlined_call_operand.vmem [shape: f32[2,1], index: 5, kind: output, shape index: {}]
  %s6 = sld [smem:[#allocation0]]
  $region42: #{tpu_custom_call.1} parent=0
    _
  %s8 = ssub.s32 1, %s6
  %s9 = scalar_select 0, %s8, %s6
  $region1: #{tpu_custom_call.1} parent=0
    #allocation2 [shape = 'u8[1024]{0}', space=vmem, size = 0x400, scoped, tag = 'input window, operand 0, single buffered']
    #allocation3 [shape = 's32[1]{0}', space=sflag, size = 0x4, scoped, tag = 'scoped memory for tpu_custom_call.1']
    #allocation4 [shape = 's32[1]{0}', space=sflag, size = 0x4, scoped, tag = 'scoped memory for tpu_custom_call.1']
    #allocation5 [shape = 'u8[1024]{0}', space=vmem, size = 0x400, scoped, tag = 'input window, operand 1, single buffered']
    #allocation6 [shape = 's32[1]{0}', space=sflag, size = 0x4, scoped, tag = 'scoped memory for tpu_custom_call.1']
    #allocation7 [shape = 'u8[512]{0}', space=smem, size = 0x200, scoped, tag = 'input window, operand 4, single buffered']
    %10 = vsyncpa [#allocation3], 0
    %11 = vsyncpa [#allocation6], 0
    %12 = vsyncpa [#allocation4], 0
    // Predicated region
    $region2: #{tpu_custom_call.1} parent=1 // pred_check
      _
    $region3: #{tpu_custom_call.1} parent=1 // pred_check_branch
      %14 = sbr.rel (0) target = $region5
    $region4: #{tpu_custom_call.1} parent=1 // pred_region
      %s16 = ssub.s32 32, 32
      %17 = vsyncadd [#allocation3], %s16
      %s19 = sshll.u32 [#allocation2], 4
      %s20 = int_to_ptr.vmem [resolvable:$true] %s19
      %22 = dma.hbm_to_vmem [thread:$0]  %s0, 32, %s20, [#allocation3]
    $region5: #{tpu_custom_call.1} parent=1 // pred_fallthru
      _
    // Predicated region
    $region6: #{tpu_custom_call.1} parent=1 // pred_check
      _
    $region7: #{tpu_custom_call.1} parent=1 // pred_check_branch
      %24 = sbr.rel (0) target = $region9
    $region8: #{tpu_custom_call.1} parent=1 // pred_region
      %s26 = ssub.s32 32, 32
      %27 = vsyncadd [#allocation6], %s26
      %s29 = sshll.u32 [#allocation5], 4
      %s30 = int_to_ptr.vmem [resolvable:$true] %s29
      %32 = dma.hbm_to_vmem [thread:$0]  %s1, 32, %s30, [#allocation6]
    $region9: #{tpu_custom_call.1} parent=1 // pred_fallthru
      _
    // Predicated region
    $region10: #{tpu_custom_call.1} parent=1 // pred_check
      _
    $region11: #{tpu_custom_call.1} parent=1 // pred_check_branch
      %34 = sbr.rel (0) target = $region13
    $region12: #{tpu_custom_call.1} parent=1 // pred_region
      _
    $region13: #{tpu_custom_call.1} parent=1 // pred_fallthru
      _
    // Predicated region
    $region14: #{tpu_custom_call.1} parent=1 // pred_check
      _
    $region15: #{tpu_custom_call.1} parent=1 // pred_check_branch
      %36 = sbr.rel (0) target = $region17
    $region16: #{tpu_custom_call.1} parent=1 // pred_region
      _
    $region17: #{tpu_custom_call.1} parent=1 // pred_fallthru
      _
    // Predicated region
    $region18: #{tpu_custom_call.1} parent=1 // pred_check
      _
    $region19: #{tpu_custom_call.1} parent=1 // pred_check_branch
      %38 = sbr.rel (0) target = $region21
    $region20: #{tpu_custom_call.1} parent=1 // pred_region
      %s40 = ssub.s32 16, 16
      %41 = vsyncadd [#allocation4], %s40
      %s43 = sshll.u32 %s4, 4
      %s44 = int_to_ptr.vmem [resolvable:$true] %s43
      %46 = dma.vmem_to_smem %s44, 16, [#allocation7], [#allocation4]
    $region21: #{tpu_custom_call.1} parent=1 // pred_fallthru
      _
    // Predicated region
    $region22: #{tpu_custom_call.1} parent=1 // pred_check
      _
    $region23: #{tpu_custom_call.1} parent=1 // pred_check_branch
      %48 = sbr.rel (0) target = $region25
    $region24: #{tpu_custom_call.1} parent=1 // pred_region
      %49 = dma.done [#allocation3], 32
    $region25: #{tpu_custom_call.1} parent=1 // pred_fallthru
      _
    // Predicated region
    $region26: #{tpu_custom_call.1} parent=1 // pred_check
      _
    $region27: #{tpu_custom_call.1} parent=1 // pred_check_branch
      %51 = sbr.rel (0) target = $region29
    $region28: #{tpu_custom_call.1} parent=1 // pred_region
      %52 = dma.done [#allocation6], 32
    $region29: #{tpu_custom_call.1} parent=1 // pred_fallthru
      _
    // Predicated region
    $region30: #{tpu_custom_call.1} parent=1 // pred_check
      _
    $region31: #{tpu_custom_call.1} parent=1 // pred_check_branch
      %54 = sbr.rel (0) target = $region33
    $region32: #{tpu_custom_call.1} parent=1 // pred_region
      %55 = dma.done [#allocation4], 16
    $region33: #{tpu_custom_call.1} parent=1 // pred_fallthru
      _
    %56 = sfence
    %v57 = vld [vmem:[#allocation2] sm:$0x3]
    %v58 = vld [vmem:[%s2] sm:$0x1]
    %v60 = vlaneseq
    %v61 = vshrl.u32 %v60, 7
    %v62 = vsub.s32 0, %v61
    %v63 = vrot.slane %v58, %v62
    %v65 = vmul.f32 %v57, %v63
    %vm66 = vcmask 123904
    %v67 = vsel %vm66, %v65, 0.0
    %68 = vadd.xlane.f32.xlu0 %v67
    %v69 = vpop.xlane.xlu0 %68
    %v70 = vld [vmem:[#allocation5] sm:$0x3]
    %v71 = vld [vmem:[%s3] sm:$0x1]
    %v73 = vlaneseq
    %v74 = vshrl.u32 %v73, 7
    %v75 = vsub.s32 0, %v74
    %v76 = vrot.slane %v71, %v75
    %v78 = vmul.f32 %v70, %v76
    %vm79 = vcmask 25600
    %v80 = vsel %vm79, %v78, 0.0
    %81 = vadd.xlane.f32.xlu0 %v80
    %v82 = vpop.xlane.xlu0 %81
    %v83 = vadd.f32 %v69, %v82
    %s84 = sld [smem:[#allocation7]]
    %v85 = vstv %s84
    %v86 = vadd.f32 %v83, %v85
    %v87 = vmax.f32 %v86, 0.0
    %s88 = sld [smem:[#allocation7 + $0x1]]
    %v89 = vstv %s88
    %v90 = vmul.f32 %v87, %v89
    %s91 = sld [smem:[#allocation7 + $0x2]]
    %v92 = vstv %s91
    %v93 = vadd.f32 %v90, %v92
    %v94 = vmax.f32 %v93, 0.0
    %vm95 = vcmask 1024
    %96 = vst.msk [vmem:[%s5] sm:$0x3] %vm95, %v94
    // Predicated region
    $region34: #{tpu_custom_call.1} parent=1 // pred_check
      _
    $region35: #{tpu_custom_call.1} parent=1 // pred_check_branch
      %98 = sbr.rel (0) target = $region37
    $region36: #{tpu_custom_call.1} parent=1 // pred_region
      _
    $region37: #{tpu_custom_call.1} parent=1 // pred_fallthru
      _
    // Predicated region
    $region38: #{tpu_custom_call.1} parent=1 // pred_check
      _
    $region39: #{tpu_custom_call.1} parent=1 // pred_check_branch
      %100 = sbr.rel (0) target = $region41
    $region40: #{tpu_custom_call.1} parent=1 // pred_region
      _
    $region41: #{tpu_custom_call.1} parent=1 // pred_fallthru
      _
    %101 = vsyncpa [#allocation3], 1
    %102 = vsyncpa [#allocation6], 1
    %103 = vsyncpa [#allocation4], 1

</llo_original>
